<compile_context>
chip_gen: v7x
topology: tpu7x:2x2x1
jax: 0.10.0
libtpu: 0.0.40
codegen_flags: <defaults>
</compile_context>

<pallas_src>
import jax
import jax.numpy as jnp
from jax.experimental import pallas as pl
from jax.experimental.pallas import tpu as pltpu


# ----------------------------------------------------------------------------
# Kernel
# ----------------------------------------------------------------------------
def mlp_kernel(x_ref, wg_ref, wu_ref, wd_ref, o_ref, acc_ref):
    """One (token-tile i, intermediate-slab j) grid step.

    x_ref:   (tm, H)      token tile (resident across j)
    wg_ref:  (H, ti)      gate-projection weight slab
    wu_ref:  (H, ti)      up-projection weight slab
    wd_ref:  (ti, H)      down-projection weight slab
    o_ref:   (tm, H)      output tile (written on last j)
    acc_ref: (tm, H) f32  VMEM accumulator for the down-proj reduction
    """
    j = pl.program_id(1)

    x = x_ref[...]
    # Two back-to-back K=H matmuls, f32 accumulation on the MXU.
    gate = jnp.dot(x, wg_ref[...], preferred_element_type=jnp.float32)  # (tm, ti)
    up = jnp.dot(x, wu_ref[...], preferred_element_type=jnp.float32)    # (tm, ti)

    # SiLU(gate) * up in float32 (EUP sigmoid, VPU mul).
    h = (gate * jax.nn.sigmoid(gate)) * up

    # Partial down-projection for this intermediate slab (f32 accumulation).
    partial = jnp.dot(h.astype(wd_ref.dtype), wd_ref[...],
                      preferred_element_type=jnp.float32)

    @pl.when(j == 0)
    def _():
        # Write the first partial directly: saves a zero-init store + RMW pass.
        acc_ref[...] = partial

    @pl.when(j > 0)
    def _():
        acc_ref[...] += partial

    @pl.when(j == pl.num_programs(1) - 1)
    def _():
        o_ref[...] = acc_ref[...].astype(o_ref.dtype)


# ----------------------------------------------------------------------------
# Tile / VMEM selection helpers
# ----------------------------------------------------------------------------
def _vmem_estimate(tm, ti, H, itemsize):
    """Conservative VMEM estimate (bytes) for one grid step, incl. the
    double-buffered pipeline tiles and Mosaic internal scratch for the f32
    gate/up/h intermediates plus the bf16/f32 cast of h."""
    dbl = 2  # pipeline double buffering
    return (dbl * tm * H * itemsize            # x token tile
            + dbl * H * ti * itemsize          # gate weight slab
            + dbl * H * ti * itemsize          # up weight slab
            + dbl * ti * H * itemsize          # down weight slab
            + dbl * tm * H * itemsize          # output tile
            + tm * H * 4                       # f32 accumulator scratch
            + tm * ti * (3 * 4 + itemsize))    # gate/up/h f32 + cast of h


def _vmem_capacity_bytes():
    """Physical VMEM per TensorCore; falls back to the smallest (v7x: 64 MiB)."""
    try:
        return int(pltpu.get_tpu_info().vmem_capacity_bytes)
    except Exception:
        return 64 << 20


def _largest_divisor_leq(n, cap, multiple):
    d = (min(cap, n) // multiple) * multiple
    while d >= multiple:
        if n % d == 0:
            return d
        d -= multiple
    return None


def _choose_tiles(T, H, I, itemsize, vmem_budget, sublane):
    """Pick the largest (tm, ti) that divides the problem and fits VMEM.
    Large tm is what amortizes weight streaming (intensity == tm flop/byte)."""
    tm_pref = [1024, 768, 512, 384, 256, 128]
    ti_pref = [512, 256, 128]

    tm_cands = [t for t in tm_pref if t <= T and T % t == 0 and t % sublane == 0]
    if not tm_cands:
        d = _largest_divisor_leq(T, 1024, sublane)
        tm_cands = [d if d is not None else T]

    ti_cands = [t for t in ti_pref if t <= I and I % t == 0]
    if not ti_cands:
        ti_cands = [I]

    for tm in tm_cands:            # biggest token tile first
        for ti in ti_cands:        # biggest slab first
            if _vmem_estimate(tm, ti, H, itemsize) <= vmem_budget:
                return tm, ti
    return tm_cands[-1], ti_cands[-1]


# ----------------------------------------------------------------------------
# Wrapper
# ----------------------------------------------------------------------------
def pallas_mlp(x, w_gate, w_up, w_down, *, tm=None, ti=None, vmem_limit_bytes=None):
    """x: (B, S, H); w_gate/w_up: (H, I); w_down: (I, H). Returns (B, S, H).

    Weights are stored pre-transposed as (in_features, out_features), i.e. the
    kernel computes x @ W  (== x @ weight.T in PyTorch).
    """
    B, S, H = x.shape
    I = w_gate.shape[1]
    T = B * S

    itemsize = jnp.dtype(x.dtype).itemsize
    sublane = 16 if itemsize == 2 else 8     # bf16 min tile is (16, 128)

    vmem_cap = _vmem_capacity_bytes()
    vmem_budget = vmem_cap - (16 << 20)      # leave headroom for compiler scratch

    auto_tm, auto_ti = _choose_tiles(T, H, I, itemsize, vmem_budget, sublane)
    tm = auto_tm if tm is None else min(tm, T)
    ti = auto_ti if ti is None else min(ti, I)

    # TODO(synk): no ragged handling -- T % tm and I % ti must divide exactly.
    assert T % tm == 0, "token count must be divisible by token tile tm"
    assert I % ti == 0, "intermediate size must be divisible by slab ti"
    assert H % 128 == 0 and ti % 128 == 0, "H and ti must be lane-aligned (x128)"
    assert tm % sublane == 0, f"tm must be a multiple of {sublane} for this dtype"

    x2 = x.reshape(T, H)

    n_token_tiles = T // tm
    w_itemsize = jnp.dtype(w_gate.dtype).itemsize
    # Advisory cost for XLA's scheduler: 3 matmuls of 2*T*H*I flops each.
    # Weights are re-streamed once per token tile.
    cost = pl.CostEstimate(
        flops=6 * T * H * I,
        transcendentals=T * I,                 # sigmoid -> exp
        bytes_accessed=(x2.size + T * H) * itemsize
        + n_token_tiles * (w_gate.size + w_up.size + w_down.size) * w_itemsize,
    )

    vmem_est = _vmem_estimate(tm, ti, H, itemsize)
    if vmem_limit_bytes is None:
        # Derived from the device's physical VMEM, not a hard-coded cap.
        vmem_limit_bytes = max(32 << 20,
                               min(int(vmem_est) + (16 << 20), vmem_cap - (8 << 20)))
    vmem_limit_bytes = int(vmem_limit_bytes)

    out2 = pl.pallas_call(
        mlp_kernel,
        out_shape=jax.ShapeDtypeStruct((T, H), x.dtype),
        grid_spec=pltpu.PrefetchScalarGridSpec(
            num_scalar_prefetch=0,
            grid=(T // tm, I // ti),                          # reduction axis last
            in_specs=[
                pl.BlockSpec((tm, H), lambda i, j: (i, 0)),   # x token tile
                pl.BlockSpec((H, ti), lambda i, j: (0, j)),   # gate weight slab
                pl.BlockSpec((H, ti), lambda i, j: (0, j)),   # up weight slab
                pl.BlockSpec((ti, H), lambda i, j: (j, 0)),   # down weight slab
            ],
            out_specs=pl.BlockSpec((tm, H), lambda i, j: (i, 0)),
            scratch_shapes=[pltpu.VMEM((tm, H), jnp.float32)],
        ),
        compiler_params=pltpu.CompilerParams(
            dimension_semantics=("parallel", "arbitrary"),
            vmem_limit_bytes=vmem_limit_bytes,
        ),
        cost_estimate=cost,
    )(x2, w_gate, w_up, w_down)

    return out2.reshape(B, S, H)


def reference_mlp(x, w_gate, w_up, w_down):
    gate = jnp.einsum("bsh,hi->bsi", x, w_gate)
    up = jnp.einsum("bsh,hi->bsi", x, w_up)
    h = jax.nn.silu(gate) * up
    return jnp.einsum("bsi,ih->bsh", h, w_down)


if __name__ == "__main__":
    # Small config: batch=2, seq=64, hidden=128, intermediate=256 (mlp_bias=False).
    B, S, H, I = 2, 64, 128, 256

    key = jax.random.PRNGKey(0)
    kx, kg, ku, kd = jax.random.split(key, 4)

    x = jax.random.normal(kx, (B, S, H), dtype=jnp.float32)
    w_gate = jax.random.normal(kg, (H, I), dtype=jnp.float32) * (1.0 / H**0.5)
    w_up = jax.random.normal(ku, (H, I), dtype=jnp.float32) * (1.0 / H**0.5)
    w_down = jax.random.normal(kd, (I, H), dtype=jnp.float32) * (1.0 / I**0.5)

    # f32 path: auto-chosen tiles (tm=128 token tile at this small T, ti=256).
    out = pallas_mlp(x, w_gate, w_up, w_down)
    out = jax.block_until_ready(out)

    ref = reference_mlp(x, w_gate, w_up, w_down)
    assert out.shape == (B, S, H)
    assert jnp.allclose(out, ref, atol=1e-4, rtol=1e-4), "f32 mismatch vs reference"

    # Exercise a multi-step reduction (I // ti = 2) explicitly.
    out2 = pallas_mlp(x, w_gate, w_up, w_down, tm=128, ti=128)
    out2 = jax.block_until_ready(out2)
    assert jnp.allclose(out2, ref, atol=1e-4, rtol=1e-4), "f32 (2-step K) mismatch"

    # bf16 path (native MXU rate): element-wise check against a bf16-input
    # reference (same quantization of activations/weights, f32 accumulation).
    xb = x.astype(jnp.bfloat16)
    wgb = w_gate.astype(jnp.bfloat16)
    wub = w_up.astype(jnp.bfloat16)
    wdb = w_down.astype(jnp.bfloat16)
    out_bf16 = pallas_mlp(xb, wgb, wub, wdb)
    out_bf16 = jax.block_until_ready(out_bf16)
    ref_bf16 = reference_mlp(xb, wgb, wub, wdb).astype(jnp.float32)
    assert jnp.allclose(out_bf16.astype(jnp.float32), ref_bf16,
                        atol=5e-2, rtol=5e-2), "bf16 output diverged from bf16 reference"

    print("KERNEL_OK")
</pallas_src>

<mosaic_0001>
module attributes {stable_mosaic.version = 11 : i64} {
  func.func @mlp_kernel(%arg0: i32, %arg1: i32, %arg2: memref<128x128xf32, #tpu.memory_space<vmem>>, %arg3: memref<128x256xf32, #tpu.memory_space<vmem>>, %arg4: memref<128x256xf32, #tpu.memory_space<vmem>>, %arg5: memref<256x128xf32, #tpu.memory_space<vmem>>, %arg6: memref<128x128xf32, #tpu.memory_space<vmem>>, %arg7: memref<128x128xf32, #tpu.memory_space<vmem>>) attributes {dimension_semantics = [#tpu.dimension_semantics<parallel>, #tpu.dimension_semantics<arbitrary>], iteration_bounds = array<i64: 1, 1>, scalar_prefetch = 0 : i64, scratch_operands = 1 : i64, tpu.core_type = #tpu.core_type<tc>, window_params = [{transform_indices = @transform_0, window_bounds = array<i64: 128, 128>}, {transform_indices = @transform_1, window_bounds = array<i64: 128, 256>}, {transform_indices = @transform_2, window_bounds = array<i64: 128, 256>}, {transform_indices = @transform_3, window_bounds = array<i64: 256, 128>}, {transform_indices = @transform_4, window_bounds = array<i64: 128, 128>}]} {
    %c0 = arith.constant 0 : index
    %c0_0 = arith.constant 0 : index
    %0 = vector.load %arg2[%c0, %c0_0] : memref<128x128xf32, #tpu.memory_space<vmem>>, vector<128x128xf32>
    %c0_1 = arith.constant 0 : index
    %c0_2 = arith.constant 0 : index
    %1 = vector.load %arg3[%c0_1, %c0_2] : memref<128x256xf32, #tpu.memory_space<vmem>>, vector<128x256xf32>
    %cst = arith.constant dense<0.000000e+00> : vector<128x256xf32>
    %2 = tpu.matmul %0, %1, %cst {dimension_numbers = #tpu.dot_dimension_numbers<[1], [0], [0], [1], [0, 0, 1, 1], [], []>} : vector<128x128xf32>, vector<128x256xf32>, vector<128x256xf32> -> vector<128x256xf32>
    %c0_3 = arith.constant 0 : index
    %c0_4 = arith.constant 0 : index
    %3 = vector.load %arg4[%c0_3, %c0_4] : memref<128x256xf32, #tpu.memory_space<vmem>>, vector<128x256xf32>
    %cst_5 = arith.constant dense<0.000000e+00> : vector<128x256xf32>
    %4 = tpu.matmul %0, %3, %cst_5 {dimension_numbers = #tpu.dot_dimension_numbers<[1], [0], [0], [1], [0, 0, 1, 1], [], []>} : vector<128x128xf32>, vector<128x256xf32>, vector<128x256xf32> -> vector<128x256xf32>
    %5 = arith.negf %2 : vector<128x256xf32>
    %6 = math.exp %5 : vector<128x256xf32>
    %cst_6 = arith.constant 1.000000e+00 : f32
    %7 = vector.broadcast %cst_6 : f32 to vector<128x256xf32>
    %8 = arith.addf %7, %6 : vector<128x256xf32>
    %9 = arith.divf %7, %8 : vector<128x256xf32>
    %10 = arith.mulf %2, %9 : vector<128x256xf32>
    %11 = arith.mulf %10, %4 : vector<128x256xf32>
    %c0_7 = arith.constant 0 : index
    %c0_8 = arith.constant 0 : index
    %12 = vector.load %arg5[%c0_7, %c0_8] : memref<256x128xf32, #tpu.memory_space<vmem>>, vector<256x128xf32>
    %cst_9 = arith.constant dense<0.000000e+00> : vector<128x128xf32>
    %13 = tpu.matmul %11, %12, %cst_9 {dimension_numbers = #tpu.dot_dimension_numbers<[1], [0], [0], [1], [0, 0, 1, 1], [], []>} : vector<128x256xf32>, vector<256x128xf32>, vector<128x128xf32> -> vector<128x128xf32>
    %c0_i32 = arith.constant 0 : i32
    %14 = arith.cmpi eq, %arg1, %c0_i32 : i32
    %15 = arith.extui %14 : i1 to i32
    %c0_i32_10 = arith.constant 0 : i32
    %16 = arith.cmpi ne, %15, %c0_i32_10 : i32
    scf.if %16 {
      %c0_15 = arith.constant 0 : index
      %c0_16 = arith.constant 0 : index
      %23 = vector.load %arg7[%c0_15, %c0_16] : memref<128x128xf32, #tpu.memory_space<vmem>>, vector<128x128xf32>
      tpu.vector_store %arg7[%c0_15, %c0_16], %13 {strides = array<i32>} : memref<128x128xf32, #tpu.memory_space<vmem>>, vector<128x128xf32>,
    } else {
    }
    %c0_i32_11 = arith.constant 0 : i32
    %17 = arith.cmpi sgt, %arg1, %c0_i32_11 : i32
    %18 = arith.extui %17 : i1 to i32
    %c0_i32_12 = arith.constant 0 : i32
    %19 = arith.cmpi ne, %18, %c0_i32_12 : i32
    scf.if %19 {
      %c0_15 = arith.constant 0 : index
      %c0_16 = arith.constant 0 : index
      %23 = vector.load %arg7[%c0_15, %c0_16] : memref<128x128xf32, #tpu.memory_space<vmem>>, vector<128x128xf32>
      %24 = arith.addf %23, %13 : vector<128x128xf32>
      %c0_17 = arith.constant 0 : index
      %c0_18 = arith.constant 0 : index
      %25 = vector.load %arg7[%c0_17, %c0_18] : memref<128x128xf32, #tpu.memory_space<vmem>>, vector<128x128xf32>
      tpu.vector_store %arg7[%c0_17, %c0_18], %24 {strides = array<i32>} : memref<128x128xf32, #tpu.memory_space<vmem>>, vector<128x128xf32>,
    } else {
    }
    %c0_i32_13 = arith.constant 0 : i32
    %20 = arith.cmpi eq, %arg1, %c0_i32_13 : i32
    %21 = arith.extui %20 : i1 to i32
    %c0_i32_14 = arith.constant 0 : i32
    %22 = arith.cmpi ne, %21, %c0_i32_14 : i32
    scf.if %22 {
      %c0_15 = arith.constant 0 : index
      %c0_16 = arith.constant 0 : index
      %23 = vector.load %arg7[%c0_15, %c0_16] : memref<128x128xf32, #tpu.memory_space<vmem>>, vector<128x128xf32>
      %c0_17 = arith.constant 0 : index
      %c0_18 = arith.constant 0 : index
      %24 = vector.load %arg6[%c0_17, %c0_18] : memref<128x128xf32, #tpu.memory_space<vmem>>, vector<128x128xf32>
      tpu.vector_store %arg6[%c0_17, %c0_18], %23 {strides = array<i32>} : memref<128x128xf32, #tpu.memory_space<vmem>>, vector<128x128xf32>,
    } else {
    }
    return
  }
  func.func @transform_0(%arg0: i32, %arg1: i32) -> (i32, i32) {
    %c0_i32 = arith.constant 0 : i32
    %c0_i32_0 = arith.constant 0 : i32
    return %arg0, %c0_i32 : i32, i32
  }
  func.func @transform_1(%arg0: i32, %arg1: i32) -> (i32, i32) {
    %c0_i32 = arith.constant 0 : i32
    %c0_i32_0 = arith.constant 0 : i32
    return %c0_i32, %arg1 : i32, i32
  }
  func.func @transform_2(%arg0: i32, %arg1: i32) -> (i32, i32) {
    %c0_i32 = arith.constant 0 : i32
    %c0_i32_0 = arith.constant 0 : i32
    return %c0_i32, %arg1 : i32, i32
  }
  func.func @transform_3(%arg0: i32, %arg1: i32) -> (i32, i32) {
    %c0_i32 = arith.constant 0 : i32
    %c0_i32_0 = arith.constant 0 : i32
    return %arg1, %c0_i32 : i32, i32
  }
  func.func @transform_4(%arg0: i32, %arg1: i32) -> (i32, i32) {
    %c0_i32 = arith.constant 0 : i32
    %c0_i32_0 = arith.constant 0 : i32
    return %arg0, %c0_i32 : i32, i32
  }
}

</mosaic_0001>

<llo_original>
// kernel: tpu_custom_call.1
$region0: #{tpu_custom_call.1}
  #allocation0 [shape = 'u32[]', space=smem, size = 0x4, offset = 0x4, fixed_abs, tag = 'smem constant byte address 0x4 - core index']
  #allocation1 [shape = 'u32[144,128]{1,0:T(1,128)}', space=vmem, size = 0x12000, scoped, tag = 'internal scratch']
  #allocation2 [shape = 'f32[128,128]{1,0:T(8,128)}', space=vmem, size = 0x10000, scoped, tag = 'scratch operand']
  %s0 = inlined_call_operand.hbm [shape: f32[128,128], index: 0, kind: input, shape index: {}]
  %s1 = inlined_call_operand.hbm [shape: f32[128,256], index: 1, kind: input, shape index: {}]
  %s2 = inlined_call_operand.hbm [shape: f32[128,256], index: 2, kind: input, shape index: {}]
  %s3 = inlined_call_operand.hbm [shape: f32[256,128], index: 3, kind: input, shape index: {}]
  %s4 = inlined_call_operand.hbm [shape: f32[128,128], index: 4, kind: output, shape index: {}]
  %s5 = sld [smem:[#allocation0]]
  $region54: #{tpu_custom_call.1} parent=0
    _
  %s7 = ssub.s32 1, %s5
  %s8 = scalar_select 0, %s7, %s5
  $region1: #{tpu_custom_call.1} parent=0
    #allocation3 [shape = 'u8[65536]{0}', space=vmem, size = 0x10000, scoped, tag = 'input window, operand 0, single buffered']
    #allocation4 [shape = 's32[1]{0}', space=sflag, size = 0x4, scoped, tag = 'scoped memory for tpu_custom_call.1']
    #allocation5 [shape = 's32[1]{0}', space=sflag, size = 0x4, scoped, tag = 'scoped memory for tpu_custom_call.1']
    #allocation6 [shape = 'u8[131072]{0}', space=vmem, size = 0x20000, scoped, tag = 'input window, operand 1, single buffered']
    #allocation7 [shape = 's32[1]{0}', space=sflag, size = 0x4, scoped, tag = 'scoped memory for tpu_custom_call.1']
    #allocation8 [shape = 'u8[131072]{0}', space=vmem, size = 0x20000, scoped, tag = 'input window, operand 2, single buffered']
    #allocation9 [shape = 'u8[131072]{0}', space=vmem, size = 0x20000, scoped, tag = 'input window, operand 3, single buffered']
    #allocation10 [shape = 's32[1]{0}', space=sflag, size = 0x4, scoped, tag = 'scoped memory for tpu_custom_call.1']
    #allocation11 [shape = 'u8[65536]{0}', space=vmem, size = 0x10000, scoped, tag = 'output window, operand 0, single buffered']
    %9 = vsyncpa [#allocation4], 0
    %10 = vsyncpa [#allocation7], 0
    %11 = vsyncpa [#allocation10], 0
    %12 = vsyncpa [#allocation5], 0
    // Predicated region
    $region2: #{tpu_custom_call.1} parent=1 // pred_check
      _
    $region3: #{tpu_custom_call.1} parent=1 // pred_check_branch
      %14 = sbr.rel (0) target = $region5
    $region4: #{tpu_custom_call.1} parent=1 // pred_region
      %s16 = ssub.s32 2048, 2048
      %17 = vsyncadd [#allocation4], %s16
      %s18 = sshll.u32 [#allocation3], 4
      %s19 = int_to_ptr.vmem [resolvable:$true] %s18
      %24 = dma.hbm_to_vmem [thread:$0]  %s0, 2048, %s19, [#allocation4], 128, 128, 8
    $region5: #{tpu_custom_call.1} parent=1 // pred_fallthru
      _
    // Predicated region
    $region6: #{tpu_custom_call.1} parent=1 // pred_check
      _
    $region7: #{tpu_custom_call.1} parent=1 // pred_check_branch
      %26 = sbr.rel (0) target = $region9
    $region8: #{tpu_custom_call.1} parent=1 // pred_region
      %s28 = ssub.s32 4096, 4096
      %29 = vsyncadd [#allocation7], %s28
      %s30 = sshll.u32 [#allocation6], 4
      %s31 = int_to_ptr.vmem [resolvable:$true] %s30
      %36 = dma.hbm_to_vmem [thread:$0]  %s1, 4096, %s31, [#allocation7], 256, 256, 16
    $region9: #{tpu_custom_call.1} parent=1 // pred_fallthru
      _
    // Predicated region
    $region10: #{tpu_custom_call.1} parent=1 // pred_check
      _
    $region11: #{tpu_custom_call.1} parent=1 // pred_check_branch
      %38 = sbr.rel (0) target = $region13
    $region12: #{tpu_custom_call.1} parent=1 // pred_region
      %s40 = ssub.s32 4096, 4096
      %41 = vsyncadd [#allocation7], %s40
      %s42 = sshll.u32 [#allocation8], 4
      %s43 = int_to_ptr.vmem [resolvable:$true] %s42
      %48 = dma.hbm_to_vmem [thread:$0]  %s2, 4096, %s43, [#allocation7], 256, 256, 16
    $region13: #{tpu_custom_call.1} parent=1 // pred_fallthru
      _
    // Predicated region
    $region14: #{tpu_custom_call.1} parent=1 // pred_check
      _
    $region15: #{tpu_custom_call.1} parent=1 // pred_check_branch
      %50 = sbr.rel (0) target = $region17
    $region16: #{tpu_custom_call.1} parent=1 // pred_region
      %s52 = ssub.s32 4096, 4096
      %53 = vsyncadd [#allocation10], %s52
      %s54 = sshll.u32 [#allocation9], 4
      %s55 = int_to_ptr.vmem [resolvable:$true] %s54
      %60 = dma.hbm_to_vmem [thread:$0]  %s3, 4096, %s55, [#allocation10], 128, 128, 8
    $region17: #{tpu_custom_call.1} parent=1 // pred_fallthru
      _
    // Predicated region
    $region18: #{tpu_custom_call.1} parent=1 // pred_check
      _
    $region19: #{tpu_custom_call.1} parent=1 // pred_check_branch
      %62 = sbr.rel (0) target = $region21
    $region20: #{tpu_custom_call.1} parent=1 // pred_region
      %63 = dma.done [#allocation4], 2048
    $region21: #{tpu_custom_call.1} parent=1 // pred_fallthru
      _
    // Predicated region
    $region22: #{tpu_custom_call.1} parent=1 // pred_check
      _
    $region23: #{tpu_custom_call.1} parent=1 // pred_check_branch
      %65 = sbr.rel (0) target = $region25
    $region24: #{tpu_custom_call.1} parent=1 // pred_region
      %66 = dma.done [#allocation7], 4096
    $region25: #{tpu_custom_call.1} parent=1 // pred_fallthru
      _
    // Predicated region
    $region26: #{tpu_custom_call.1} parent=1 // pred_check
      _
    $region27: #{tpu_custom_call.1} parent=1 // pred_check_branch
      %68 = sbr.rel (0) target = $region29
    $region28: #{tpu_custom_call.1} parent=1 // pred_region
      %69 = dma.done [#allocation7], 4096
    $region29: #{tpu_custom_call.1} parent=1 // pred_fallthru
      _
    // Predicated region
    $region30: #{tpu_custom_call.1} parent=1 // pred_check
      _
    $region31: #{tpu_custom_call.1} parent=1 // pred_check_branch
      %71 = sbr.rel (0) target = $region33
    $region32: #{tpu_custom_call.1} parent=1 // pred_region
      %72 = dma.done [#allocation10], 4096
    $region33: #{tpu_custom_call.1} parent=1 // pred_fallthru
      _
    %v73 = vld [vmem:[#allocation3] sm:$0xff]
    %v74 = vld [vmem:[#allocation3 + $0x8] sm:$0xff]
    %v75 = vld [vmem:[#allocation3 + $0x10] sm:$0xff]
    %v76 = vld [vmem:[#allocation3 + $0x18] sm:$0xff]
    %v77 = vld [vmem:[#allocation3 + $0x20] sm:$0xff]
    %v78 = vld [vmem:[#allocation3 + $0x28] sm:$0xff]
    %v79 = vld [vmem:[#allocation3 + $0x30] sm:$0xff]
    %v80 = vld [vmem:[#allocation3 + $0x38] sm:$0xff]
    %v81 = vld [vmem:[#allocation3 + $0x40] sm:$0xff]
    %v82 = vld [vmem:[#allocation3 + $0x48] sm:$0xff]
    %v83 = vld [vmem:[#allocation3 + $0x50] sm:$0xff]
    %v84 = vld [vmem:[#allocation3 + $0x58] sm:$0xff]
    %v85 = vld [vmem:[#allocation3 + $0x60] sm:$0xff]
    %v86 = vld [vmem:[#allocation3 + $0x68] sm:$0xff]
    %v87 = vld [vmem:[#allocation3 + $0x70] sm:$0xff]
    %v88 = vld [vmem:[#allocation3 + $0x78] sm:$0xff]
    %v89 = vld [vmem:[#allocation6] sm:$0xff]
    %v90 = vld [vmem:[#allocation6 + $0x8] sm:$0xff]
    %v91 = vld [vmem:[#allocation6 + $0x10] sm:$0xff]
    %v92 = vld [vmem:[#allocation6 + $0x18] sm:$0xff]
    %v93 = vld [vmem:[#allocation6 + $0x20] sm:$0xff]
    %v94 = vld [vmem:[#allocation6 + $0x28] sm:$0xff]
    %v95 = vld [vmem:[#allocation6 + $0x30] sm:$0xff]
    %v96 = vld [vmem:[#allocation6 + $0x38] sm:$0xff]
    %v97 = vld [vmem:[#allocation6 + $0x40] sm:$0xff]
    %v98 = vld [vmem:[#allocation6 + $0x48] sm:$0xff]
    %v99 = vld [vmem:[#allocation6 + $0x50] sm:$0xff]
    %v100 = vld [vmem:[#allocation6 + $0x58] sm:$0xff]
    %v101 = vld [vmem:[#allocation6 + $0x60] sm:$0xff]
    %v102 = vld [vmem:[#allocation6 + $0x68] sm:$0xff]
    %v103 = vld [vmem:[#allocation6 + $0x70] sm:$0xff]
    %v104 = vld [vmem:[#allocation6 + $0x78] sm:$0xff]
    %v105 = vld [vmem:[#allocation6 + $0x80] sm:$0xff]
    %v106 = vld [vmem:[#allocation6 + $0x88] sm:$0xff]
    %v107 = vld [vmem:[#allocation6 + $0x90] sm:$0xff]
    %v108 = vld [vmem:[#allocation6 + $0x98] sm:$0xff]
    %v109 = vld [vmem:[#allocation6 + $0xa0] sm:$0xff]
    %v110 = vld [vmem:[#allocation6 + $0xa8] sm:$0xff]
    %v111 = vld [vmem:[#allocation6 + $0xb0] sm:$0xff]
    %v112 = vld [vmem:[#allocation6 + $0xb8] sm:$0xff]
    %v113 = vld [vmem:[#allocation6 + $0xc0] sm:$0xff]
    %v114 = vld [vmem:[#allocation6 + $0xc8] sm:$0xff]
    %v115 = vld [vmem:[#allocation6 + $0xd0] sm:$0xff]
    %v116 = vld [vmem:[#allocation6 + $0xd8] sm:$0xff]
    %v117 = vld [vmem:[#allocation6 + $0xe0] sm:$0xff]
    %v118 = vld [vmem:[#allocation6 + $0xe8] sm:$0xff]
    %v119 = vld [vmem:[#allocation6 + $0xf0] sm:$0xff]
    %v120 = vld [vmem:[#allocation6 + $0xf8] sm:$0xff]
    %121 = vmatprep.subr.mxu0 %v90
    %122 = vmatpush1.msra.mxu0 %v89
    %123 = vmatprep.subr.mxu0 %v92
    %124 = vmatpush1.msra.mxu0 %v91
    %125 = vmatprep.subr.mxu0 %v94
    %126 = vmatpush1.msra.mxu0 %v93
    %127 = vmatprep.subr.mxu0 %v96
    %128 = vmatpush1.msra.mxu0 %v95
    %129 = vmatprep.subr.mxu0 %v98
    %130 = vmatpush1.msra.mxu0 %v97
    %131 = vmatprep.subr.mxu0 %v100
    %132 = vmatpush1.msra.mxu0 %v99
    %133 = vmatprep.subr.mxu0 %v102
    %134 = vmatpush1.msra.mxu0 %v101
    %135 = vmatprep.subr.mxu0 %v104
    %136 = vmatpush1.msra.mxu0 %v103
    %137 = vmatprep.subr.mxu0 %v106
    %138 = vmatpush1.msra.mxu0 %v105
    %139 = vmatprep.subr.mxu0 %v108
    %140 = vmatpush1.msra.mxu0 %v107
    %141 = vmatprep.subr.mxu0 %v110
    %142 = vmatpush1.msra.mxu0 %v109
    %143 = vmatprep.subr.mxu0 %v112
    %144 = vmatpush1.msra.mxu0 %v111
    %145 = vmatprep.subr.mxu0 %v114
    %146 = vmatpush1.msra.mxu0 %v113
    %147 = vmatprep.subr.mxu0 %v116
    %148 = vmatpush1.msra.mxu0 %v115
    %149 = vmatprep.subr.mxu0 %v118
    %150 = vmatpush1.msra.mxu0 %v117
    %151 = vmatprep.subr.mxu0 %v120
    %152 = vmatpush1.msra.mxu0 %v119
    %153 = vmatprep.subr.mxu0 0.0
    %154 = vmatpush1.msra.mxu0 0.0
    %155 = vmatprep.subr.mxu0 0.0
    %156 = vmatpush1.msra.mxu0 0.0
    %157 = vmatprep.subr.mxu0 0.0
    %158 = vmatpush1.msra.mxu0 0.0
    %159 = vmatprep.subr.mxu0 0.0
    %160 = vmatpush1.msra.mxu0 0.0
    %161 = vmatprep.subr.mxu0 0.0
    %162 = vmatpush1.msra.mxu0 0.0
    %163 = vmatprep.subr.mxu0 0.0
    %164 = vmatpush1.msra.mxu0 0.0
    %165 = vmatprep.subr.mxu0 0.0
    %166 = vmatpush1.msra.mxu0 0.0
    %167 = vmatprep.subr.mxu0 0.0
    %168 = vmatpush1.msra.mxu0 0.0
    %169 = vmatprep.subr.mxu0 0.0
    %170 = vmatpush1.msra.mxu0 0.0
    %171 = vmatprep.subr.mxu0 0.0
    %172 = vmatpush1.msra.mxu0 0.0
    %173 = vmatprep.subr.mxu0 0.0
    %174 = vmatpush1.msra.mxu0 0.0
    %175 = vmatprep.subr.mxu0 0.0
    %176 = vmatpush1.msra.mxu0 0.0
    %177 = vmatprep.subr.mxu0 0.0
    %178 = vmatpush1.msra.mxu0 0.0
    %179 = vmatprep.subr.mxu0 0.0
    %180 = vmatpush1.msra.mxu0 0.0
    %181 = vmatprep.subr.mxu0 0.0
    %182 = vmatpush1.msra.mxu0 0.0
    %183 = vmatprep.subr.mxu0 0.0
    %184 = vmatpush1.msra.mxu0 0.0
    %185 = vmatprep.mubr.f32.mxu0 0.0
    %186 = vmatmul.mubr.f32.gmra.mrb[0].mxu0 %v73
    %v187 = vpop.f32.mrb[0].mxu0
    %v188 = vadd.f32 0.0, %v187
    %v189 = vpop.f32.mrb[0].mxu0
    %v190 = vadd.f32 0.0, %v189
    %191 = vmatprep.mubr.f32.mxu0 0.0
    %192 = vmatmul.mubr.f32.gmra.mrb[0].mxu0 %v74
    %v193 = vpop.f32.mrb[0].mxu0
    %v194 = vadd.f32 0.0, %v193
    %v195 = vpop.f32.mrb[0].mxu0
    %v196 = vadd.f32 0.0, %v195
    %197 = vmatprep.mubr.f32.mxu0 0.0
    %198 = vmatmul.mubr.f32.gmra.mrb[0].mxu0 %v75
    %v199 = vpop.f32.mrb[0].mxu0
    %v200 = vadd.f32 0.0, %v199
    %v201 = vpop.f32.mrb[0].mxu0
    %v202 = vadd.f32 0.0, %v201
    %203 = vmatprep.mubr.f32.mxu0 0.0
    %204 = vmatmul.mubr.f32.gmra.mrb[0].mxu0 %v76
    %v205 = vpop.f32.mrb[0].mxu0
    %v206 = vadd.f32 0.0, %v205
    %v207 = vpop.f32.mrb[0].mxu0
    %v208 = vadd.f32 0.0, %v207
    %209 = vmatprep.mubr.f32.mxu0 0.0
    %210 = vmatmul.mubr.f32.gmra.mrb[0].mxu0 %v77
    %v211 = vpop.f32.mrb[0].mxu0
    %v212 = vadd.f32 0.0, %v211
    %v213 = vpop.f32.mrb[0].mxu0
    %v214 = vadd.f32 0.0, %v213
    %215 = vmatprep.mubr.f32.mxu0 0.0
    %216 = vmatmul.mubr.f32.gmra.mrb[0].mxu0 %v78
    %v217 = vpop.f32.mrb[0].mxu0
    %v218 = vadd.f32 0.0, %v217
    %v219 = vpop.f32.mrb[0].mxu0
    %v220 = vadd.f32 0.0, %v219
    %221 = vmatprep.mubr.f32.mxu0 0.0
    %222 = vmatmul.mubr.f32.gmra.mrb[0].mxu0 %v79
    %v223 = vpop.f32.mrb[0].mxu0
    %v224 = vadd.f32 0.0, %v223
    %v225 = vpop.f32.mrb[0].mxu0
    %v226 = vadd.f32 0.0, %v225
    %227 = vmatprep.mubr.f32.mxu0 0.0
    %228 = vmatmul.mubr.f32.gmra.mrb[0].mxu0 %v80
    %v229 = vpop.f32.mrb[0].mxu0
    %v230 = vadd.f32 0.0, %v229
    %v231 = vpop.f32.mrb[0].mxu0
    %v232 = vadd.f32 0.0, %v231
    %233 = vmatprep.mubr.f32.mxu0 0.0
    %234 = vmatmul.mubr.f32.gmra.mrb[0].mxu0 %v81
    %v235 = vpop.f32.mrb[0].mxu0
    %v236 = vadd.f32 0.0, %v235
    %v237 = vpop.f32.mrb[0].mxu0
    %v238 = vadd.f32 0.0, %v237
    %239 = vmatprep.mubr.f32.mxu0 0.0
    %240 = vmatmul.mubr.f32.gmra.mrb[0].mxu0 %v82
    %v241 = vpop.f32.mrb[0].mxu0
    %v242 = vadd.f32 0.0, %v241
    %v243 = vpop.f32.mrb[0].mxu0
    %v244 = vadd.f32 0.0, %v243
    %245 = vmatprep.mubr.f32.mxu0 0.0
    %246 = vmatmul.mubr.f32.gmra.mrb[0].mxu0 %v83
    %v247 = vpop.f32.mrb[0].mxu0
    %v248 = vadd.f32 0.0, %v247
    %v249 = vpop.f32.mrb[0].mxu0
    %v250 = vadd.f32 0.0, %v249
    %251 = vmatprep.mubr.f32.mxu0 0.0
    %252 = vmatmul.mubr.f32.gmra.mrb[0].mxu0 %v84
    %v253 = vpop.f32.mrb[0].mxu0
    %v254 = vadd.f32 0.0, %v253
    %v255 = vpop.f32.mrb[0].mxu0
    %v256 = vadd.f32 0.0, %v255
    %257 = vmatprep.mubr.f32.mxu0 0.0
    %258 = vmatmul.mubr.f32.gmra.mrb[0].mxu0 %v85
    %v259 = vpop.f32.mrb[0].mxu0
    %v260 = vadd.f32 0.0, %v259
    %v261 = vpop.f32.mrb[0].mxu0
    %v262 = vadd.f32 0.0, %v261
    %263 = vmatprep.mubr.f32.mxu0 0.0
    %264 = vmatmul.mubr.f32.gmra.mrb[0].mxu0 %v86
    %v265 = vpop.f32.mrb[0].mxu0
    %v266 = vadd.f32 0.0, %v265
    %v267 = vpop.f32.mrb[0].mxu0
    %v268 = vadd.f32 0.0, %v267
    %269 = vmatprep.mubr.f32.mxu0 0.0
    %270 = vmatmul.mubr.f32.gmra.mrb[0].mxu0 %v87
    %v271 = vpop.f32.mrb[0].mxu0
    %v272 = vadd.f32 0.0, %v271
    %v273 = vpop.f32.mrb[0].mxu0
    %v274 = vadd.f32 0.0, %v273
    %275 = vmatprep.mubr.f32.mxu0 0.0
    %276 = vmatmul.mubr.f32.gmra.mrb[0].mxu0 %v88
    %v277 = vpop.f32.mrb[0].mxu0
    %v278 = vadd.f32 0.0, %v277
    %v279 = vpop.f32.mrb[0].mxu0
    %v280 = vadd.f32 0.0, %v279
    %281 = vdwg.mxu0
    %v282 = vld [vmem:[#allocation8] sm:$0xff]
    %v283 = vld [vmem:[#allocation8 + $0x8] sm:$0xff]
    %v284 = vld [vmem:[#allocation8 + $0x10] sm:$0xff]
    %v285 = vld [vmem:[#allocation8 + $0x18] sm:$0xff]
    %v286 = vld [vmem:[#allocation8 + $0x20] sm:$0xff]
    %v287 = vld [vmem:[#allocation8 + $0x28] sm:$0xff]
    %v288 = vld [vmem:[#allocation8 + $0x30] sm:$0xff]
    %v289 = vld [vmem:[#allocation8 + $0x38] sm:$0xff]
    %v290 = vld [vmem:[#allocation8 + $0x40] sm:$0xff]
    %v291 = vld [vmem:[#allocation8 + $0x48] sm:$0xff]
    %v292 = vld [vmem:[#allocation8 + $0x50] sm:$0xff]
    %v293 = vld [vmem:[#allocation8 + $0x58] sm:$0xff]
    %v294 = vld [vmem:[#allocation8 + $0x60] sm:$0xff]
    %v295 = vld [vmem:[#allocation8 + $0x68] sm:$0xff]
    %v296 = vld [vmem:[#allocation8 + $0x70] sm:$0xff]
    %v297 = vld [vmem:[#allocation8 + $0x78] sm:$0xff]
    %v298 = vld [vmem:[#allocation8 + $0x80] sm:$0xff]
    %v299 = vld [vmem:[#allocation8 + $0x88] sm:$0xff]
    %v300 = vld [vmem:[#allocation8 + $0x90] sm:$0xff]
    %v301 = vld [vmem:[#allocation8 + $0x98] sm:$0xff]
    %v302 = vld [vmem:[#allocation8 + $0xa0] sm:$0xff]
    %v303 = vld [vmem:[#allocation8 + $0xa8] sm:$0xff]
    %v304 = vld [vmem:[#allocation8 + $0xb0] sm:$0xff]
    %v305 = vld [vmem:[#allocation8 + $0xb8] sm:$0xff]
    %v306 = vld [vmem:[#allocation8 + $0xc0] sm:$0xff]
    %v307 = vld [vmem:[#allocation8 + $0xc8] sm:$0xff]
    %v308 = vld [vmem:[#allocation8 + $0xd0] sm:$0xff]
    %v309 = vld [vmem:[#allocation8 + $0xd8] sm:$0xff]
    %v310 = vld [vmem:[#allocation8 + $0xe0] sm:$0xff]
    %v311 = vld [vmem:[#allocation8 + $0xe8] sm:$0xff]
    %v312 = vld [vmem:[#allocation8 + $0xf0] sm:$0xff]
    %v313 = vld [vmem:[#allocation8 + $0xf8] sm:$0xff]
    %314 = vmatprep.subr.mxu0 %v283
    %315 = vmatpush1.msra.mxu0 %v282
    %316 = vmatprep.subr.mxu0 %v285
    %317 = vmatpush1.msra.mxu0 %v284
    %318 = vmatprep.subr.mxu0 %v287
    %319 = vmatpush1.msra.mxu0 %v286
    %320 = vmatprep.subr.mxu0 %v289
    %321 = vmatpush1.msra.mxu0 %v288
    %322 = vmatprep.subr.mxu0 %v291
    %323 = vmatpush1.msra.mxu0 %v290
    %324 = vmatprep.subr.mxu0 %v293
    %325 = vmatpush1.msra.mxu0 %v292
    %326 = vmatprep.subr.mxu0 %v295
    %327 = vmatpush1.msra.mxu0 %v294
    %328 = vmatprep.subr.mxu0 %v297
    %329 = vmatpush1.msra.mxu0 %v296
    %330 = vmatprep.subr.mxu0 %v299
    %331 = vmatpush1.msra.mxu0 %v298
    %332 = vmatprep.subr.mxu0 %v301
    %333 = vmatpush1.msra.mxu0 %v300
    %334 = vmatprep.subr.mxu0 %v303
    %335 = vmatpush1.msra.mxu0 %v302
    %336 = vmatprep.subr.mxu0 %v305
    %337 = vmatpush1.msra.mxu0 %v304
    %338 = vmatprep.subr.mxu0 %v307
    %339 = vmatpush1.msra.mxu0 %v306
    %340 = vmatprep.subr.mxu0 %v309
    %341 = vmatpush1.msra.mxu0 %v308
    %342 = vmatprep.subr.mxu0 %v311
    %343 = vmatpush1.msra.mxu0 %v310
    %344 = vmatprep.subr.mxu0 %v313
    %345 = vmatpush1.msra.mxu0 %v312
    %346 = vmatprep.subr.mxu0 0.0
    %347 = vmatpush1.msra.mxu0 0.0
    %348 = vmatprep.subr.mxu0 0.0
    %349 = vmatpush1.msra.mxu0 0.0
    %350 = vmatprep.subr.mxu0 0.0
    %351 = vmatpush1.msra.mxu0 0.0
    %352 = vmatprep.subr.mxu0 0.0
    %353 = vmatpush1.msra.mxu0 0.0
    %354 = vmatprep.subr.mxu0 0.0
    %355 = vmatpush1.msra.mxu0 0.0
    %356 = vmatprep.subr.mxu0 0.0
    %357 = vmatpush1.msra.mxu0 0.0
    %358 = vmatprep.subr.mxu0 0.0
    %359 = vmatpush1.msra.mxu0 0.0
    %360 = vmatprep.subr.mxu0 0.0
    %361 = vmatpush1.msra.mxu0 0.0
    %362 = vmatprep.subr.mxu0 0.0
    %363 = vmatpush1.msra.mxu0 0.0
    %364 = vmatprep.subr.mxu0 0.0
    %365 = vmatpush1.msra.mxu0 0.0
    %366 = vmatprep.subr.mxu0 0.0
    %367 = vmatpush1.msra.mxu0 0.0
    %368 = vmatprep.subr.mxu0 0.0
    %369 = vmatpush1.msra.mxu0 0.0
    %370 = vmatprep.subr.mxu0 0.0
    %371 = vmatpush1.msra.mxu0 0.0
    %372 = vmatprep.subr.mxu0 0.0
    %373 = vmatpush1.msra.mxu0 0.0
    %374 = vmatprep.subr.mxu0 0.0
    %375 = vmatpush1.msra.mxu0 0.0
    %376 = vmatprep.subr.mxu0 0.0
    %377 = vmatpush1.msra.mxu0 0.0
    %378 = vmatprep.mubr.f32.mxu0 0.0
    %379 = vmatmul.mubr.f32.gmra.mrb[0].mxu0 %v73
    %v380 = vpop.f32.mrb[0].mxu0
    %v381 = vadd.f32 0.0, %v380
    %v382 = vpop.f32.mrb[0].mxu0
    %v383 = vadd.f32 0.0, %v382
    %384 = vmatprep.mubr.f32.mxu0 0.0
    %385 = vmatmul.mubr.f32.gmra.mrb[0].mxu0 %v74
    %v386 = vpop.f32.mrb[0].mxu0
    %v387 = vadd.f32 0.0, %v386
    %v388 = vpop.f32.mrb[0].mxu0
    %v389 = vadd.f32 0.0, %v388
    %390 = vmatprep.mubr.f32.mxu0 0.0
    %391 = vmatmul.mubr.f32.gmra.mrb[0].mxu0 %v75
    %v392 = vpop.f32.mrb[0].mxu0
    %v393 = vadd.f32 0.0, %v392
    %v394 = vpop.f32.mrb[0].mxu0
    %v395 = vadd.f32 0.0, %v394
    %396 = vmatprep.mubr.f32.mxu0 0.0
    %397 = vmatmul.mubr.f32.gmra.mrb[0].mxu0 %v76
    %v398 = vpop.f32.mrb[0].mxu0
    %v399 = vadd.f32 0.0, %v398
    %v400 = vpop.f32.mrb[0].mxu0
    %v401 = vadd.f32 0.0, %v400
    %402 = vmatprep.mubr.f32.mxu0 0.0
    %403 = vmatmul.mubr.f32.gmra.mrb[0].mxu0 %v77
    %v404 = vpop.f32.mrb[0].mxu0
    %v405 = vadd.f32 0.0, %v404
    %v406 = vpop.f32.mrb[0].mxu0
    %v407 = vadd.f32 0.0, %v406
    %408 = vmatprep.mubr.f32.mxu0 0.0
    %409 = vmatmul.mubr.f32.gmra.mrb[0].mxu0 %v78
    %v410 = vpop.f32.mrb[0].mxu0
    %v411 = vadd.f32 0.0, %v410
    %v412 = vpop.f32.mrb[0].mxu0
    %v413 = vadd.f32 0.0, %v412
    %414 = vmatprep.mubr.f32.mxu0 0.0
    %415 = vmatmul.mubr.f32.gmra.mrb[0].mxu0 %v79
    %v416 = vpop.f32.mrb[0].mxu0
    %v417 = vadd.f32 0.0, %v416
    %v418 = vpop.f32.mrb[0].mxu0
    %v419 = vadd.f32 0.0, %v418
    %420 = vmatprep.mubr.f32.mxu0 0.0
    %421 = vmatmul.mubr.f32.gmra.mrb[0].mxu0 %v80
    %v422 = vpop.f32.mrb[0].mxu0
    %v423 = vadd.f32 0.0, %v422
    %v424 = vpop.f32.mrb[0].mxu0
    %v425 = vadd.f32 0.0, %v424
    %426 = vmatprep.mubr.f32.mxu0 0.0
    %427 = vmatmul.mubr.f32.gmra.mrb[0].mxu0 %v81
    %v428 = vpop.f32.mrb[0].mxu0
    %v429 = vadd.f32 0.0, %v428
    %v430 = vpop.f32.mrb[0].mxu0
    %v431 = vadd.f32 0.0, %v430
    %432 = vmatprep.mubr.f32.mxu0 0.0
    %433 = vmatmul.mubr.f32.gmra.mrb[0].mxu0 %v82
    %v434 = vpop.f32.mrb[0].mxu0
    %v435 = vadd.f32 0.0, %v434
    %v436 = vpop.f32.mrb[0].mxu0
    %v437 = vadd.f32 0.0, %v436
    %438 = vmatprep.mubr.f32.mxu0 0.0
    %439 = vmatmul.mubr.f32.gmra.mrb[0].mxu0 %v83
    %v440 = vpop.f32.mrb[0].mxu0
    %v441 = vadd.f32 0.0, %v440
    %v442 = vpop.f32.mrb[0].mxu0
    %v443 = vadd.f32 0.0, %v442
    %444 = vmatprep.mubr.f32.mxu0 0.0
    %445 = vmatmul.mubr.f32.gmra.mrb[0].mxu0 %v84
    %v446 = vpop.f32.mrb[0].mxu0
    %v447 = vadd.f32 0.0, %v446
    %v448 = vpop.f32.mrb[0].mxu0
    %v449 = vadd.f32 0.0, %v448
    %450 = vmatprep.mubr.f32.mxu0 0.0
    %451 = vmatmul.mubr.f32.gmra.mrb[0].mxu0 %v85
    %v452 = vpop.f32.mrb[0].mxu0
    %v453 = vadd.f32 0.0, %v452
    %v454 = vpop.f32.mrb[0].mxu0
    %v455 = vadd.f32 0.0, %v454
    %456 = vmatprep.mubr.f32.mxu0 0.0
    %457 = vmatmul.mubr.f32.gmra.mrb[0].mxu0 %v86
    %v458 = vpop.f32.mrb[0].mxu0
    %v459 = vadd.f32 0.0, %v458
    %v460 = vpop.f32.mrb[0].mxu0
    %v461 = vadd.f32 0.0, %v460
    %462 = vmatprep.mubr.f32.mxu0 0.0
    %463 = vmatmul.mubr.f32.gmra.mrb[0].mxu0 %v87
    %v464 = vpop.f32.mrb[0].mxu0
    %v465 = vadd.f32 0.0, %v464
    %v466 = vpop.f32.mrb[0].mxu0
    %v467 = vadd.f32 0.0, %v466
    %468 = vmatprep.mubr.f32.mxu0 0.0
    %469 = vmatmul.mubr.f32.gmra.mrb[0].mxu0 %v88
    %v470 = vpop.f32.mrb[0].mxu0
    %v471 = vadd.f32 0.0, %v470
    %v472 = vpop.f32.mrb[0].mxu0
    %v473 = vadd.f32 0.0, %v472
    %474 = vdwg.mxu0
    %v475 = vxor.u32 %v188, 2147483648
    %v476 = vxor.u32 %v190, 2147483648
    %v477 = vxor.u32 %v194, 2147483648
    %v478 = vxor.u32 %v196, 2147483648
    %v479 = vxor.u32 %v200, 2147483648
    %v480 = vxor.u32 %v202, 2147483648
    %v481 = vxor.u32 %v206, 2147483648
    %v482 = vxor.u32 %v208, 2147483648
    %v483 = vxor.u32 %v212, 2147483648
    %v484 = vxor.u32 %v214, 2147483648
    %v485 = vxor.u32 %v218, 2147483648
    %v486 = vxor.u32 %v220, 2147483648
    %v487 = vxor.u32 %v224, 2147483648
    %v488 = vxor.u32 %v226, 2147483648
    %v489 = vxor.u32 %v230, 2147483648
    %v490 = vxor.u32 %v232, 2147483648
    %v491 = vxor.u32 %v236, 2147483648
    %v492 = vxor.u32 %v238, 2147483648
    %v493 = vxor.u32 %v242, 2147483648
    %v494 = vxor.u32 %v244, 2147483648
    %v495 = vxor.u32 %v248, 2147483648
    %v496 = vxor.u32 %v250, 2147483648
    %v497 = vxor.u32 %v254, 2147483648
    %v498 = vxor.u32 %v256, 2147483648
    %v499 = vxor.u32 %v260, 2147483648
    %v500 = vxor.u32 %v262, 2147483648
    %v501 = vxor.u32 %v266, 2147483648
    %v502 = vxor.u32 %v268, 2147483648
    %v503 = vxor.u32 %v272, 2147483648
    %v504 = vxor.u32 %v274, 2147483648
    %v505 = vxor.u32 %v278, 2147483648
    %v506 = vxor.u32 %v280, 2147483648
    %v507 = vmul.f32 %v475, 1.442695
    %v508 = vpow.pop %v507
    %v509 = vmul.f32 %v476, 1.442695
    %v510 = vpow.pop %v509
    %v511 = vmul.f32 %v477, 1.442695
    %v512 = vpow.pop %v511
    %v513 = vmul.f32 %v478, 1.442695
    %v514 = vpow.pop %v513
    %v515 = vmul.f32 %v479, 1.442695
    %v516 = vpow.pop %v515
    %v517 = vmul.f32 %v480, 1.442695
    %v518 = vpow.pop %v517
    %v519 = vmul.f32 %v481, 1.442695
    %v520 = vpow.pop %v519
    %v521 = vmul.f32 %v482, 1.442695
    %v522 = vpow.pop %v521
    %v523 = vmul.f32 %v483, 1.442695
    %v524 = vpow.pop %v523
    %v525 = vmul.f32 %v484, 1.442695
    %v526 = vpow.pop %v525
    %v527 = vmul.f32 %v485, 1.442695
    %v528 = vpow.pop %v527
    %v529 = vmul.f32 %v486, 1.442695
    %v530 = vpow.pop %v529
    %v531 = vmul.f32 %v487, 1.442695
    %v532 = vpow.pop %v531
    %v533 = vmul.f32 %v488, 1.442695
    %v534 = vpow.pop %v533
    %v535 = vmul.f32 %v489, 1.442695
    %v536 = vpow.pop %v535
    %v537 = vmul.f32 %v490, 1.442695
    %v538 = vpow.pop %v537
    %v539 = vmul.f32 %v491, 1.442695
    %v540 = vpow.pop %v539
    %v541 = vmul.f32 %v492, 1.442695
    %v542 = vpow.pop %v541
    %v543 = vmul.f32 %v493, 1.442695
    %v544 = vpow.pop %v543
    %v545 = vmul.f32 %v494, 1.442695
    %v546 = vpow.pop %v545
    %v547 = vmul.f32 %v495, 1.442695
    %v548 = vpow.pop %v547
    %v549 = vmul.f32 %v496, 1.442695
    %v550 = vpow.pop %v549
    %v551 = vmul.f32 %v497, 1.442695
    %v552 = vpow.pop %v551
    %v553 = vmul.f32 %v498, 1.442695
    %v554 = vpow.pop %v553
    %v555 = vmul.f32 %v499, 1.442695
    %v556 = vpow.pop %v555
    %v557 = vmul.f32 %v500, 1.442695
    %v558 = vpow.pop %v557
    %v559 = vmul.f32 %v501, 1.442695
    %v560 = vpow.pop %v559
    %v561 = vmul.f32 %v502, 1.442695
    %v562 = vpow.pop %v561
    %v563 = vmul.f32 %v503, 1.442695
    %v564 = vpow.pop %v563
    %v565 = vmul.f32 %v504, 1.442695
    %v566 = vpow.pop %v565
    %v567 = vmul.f32 %v505, 1.442695
    %v568 = vpow.pop %v567
    %v569 = vmul.f32 %v506, 1.442695
    %v570 = vpow.pop %v569
    %v571 = vadd.f32 %v508, 1.0
    %v572 = vadd.f32 %v510, 1.0
    %v573 = vadd.f32 %v512, 1.0
    %v574 = vadd.f32 %v514, 1.0
    %v575 = vadd.f32 %v516, 1.0
    %v576 = vadd.f32 %v518, 1.0
    %v577 = vadd.f32 %v520, 1.0
    %v578 = vadd.f32 %v522, 1.0
    %v579 = vadd.f32 %v524, 1.0
    %v580 = vadd.f32 %v526, 1.0
    %v581 = vadd.f32 %v528, 1.0
    %v582 = vadd.f32 %v530, 1.0
    %v583 = vadd.f32 %v532, 1.0
    %v584 = vadd.f32 %v534, 1.0
    %v585 = vadd.f32 %v536, 1.0
    %v586 = vadd.f32 %v538, 1.0
    %v587 = vadd.f32 %v540, 1.0
    %v588 = vadd.f32 %v542, 1.0
    %v589 = vadd.f32 %v544, 1.0
    %v590 = vadd.f32 %v546, 1.0
    %v591 = vadd.f32 %v548, 1.0
    %v592 = vadd.f32 %v550, 1.0
    %v593 = vadd.f32 %v552, 1.0
    %v594 = vadd.f32 %v554, 1.0
    %v595 = vadd.f32 %v556, 1.0
    %v596 = vadd.f32 %v558, 1.0
    %v597 = vadd.f32 %v560, 1.0
    %v598 = vadd.f32 %v562, 1.0
    %v599 = vadd.f32 %v564, 1.0
    %v600 = vadd.f32 %v566, 1.0
    %v601 = vadd.f32 %v568, 1.0
    %v602 = vadd.f32 %v570, 1.0
    %v603 = vrcp.pop %v571
    %v604 = vmul.f32 1.0, %v603
    %v605 = vrcp.pop %v572
    %v606 = vmul.f32 1.0, %v605
    %v607 = vrcp.pop %v573
    %v608 = vmul.f32 1.0, %v607
    %v609 = vrcp.pop %v574
    %v610 = vmul.f32 1.0, %v609
    %v611 = vrcp.pop %v575
    %v612 = vmul.f32 1.0, %v611
    %v613 = vrcp.pop %v576
    %v614 = vmul.f32 1.0, %v613
    %v615 = vrcp.pop %v577
    %v616 = vmul.f32 1.0, %v615
    %v617 = vrcp.pop %v578
    %v618 = vmul.f32 1.0, %v617
    %v619 = vrcp.pop %v579
    %v620 = vmul.f32 1.0, %v619
    %v621 = vrcp.pop %v580
    %v622 = vmul.f32 1.0, %v621
    %v623 = vrcp.pop %v581
    %v624 = vmul.f32 1.0, %v623
    %v625 = vrcp.pop %v582
    %v626 = vmul.f32 1.0, %v625
    %v627 = vrcp.pop %v583
    %v628 = vmul.f32 1.0, %v627
    %v629 = vrcp.pop %v584
    %v630 = vmul.f32 1.0, %v629
    %v631 = vrcp.pop %v585
    %v632 = vmul.f32 1.0, %v631
    %v633 = vrcp.pop %v586
    %v634 = vmul.f32 1.0, %v633
    %v635 = vrcp.pop %v587
    %v636 = vmul.f32 1.0, %v635
    %v637 = vrcp.pop %v588
    %v638 = vmul.f32 1.0, %v637
    %v639 = vrcp.pop %v589
    %v640 = vmul.f32 1.0, %v639
    %v641 = vrcp.pop %v590
    %v642 = vmul.f32 1.0, %v641
    %v643 = vrcp.pop %v591
    %v644 = vmul.f32 1.0, %v643
    %v645 = vrcp.pop %v592
    %v646 = vmul.f32 1.0, %v645
    %v647 = vrcp.pop %v593
    %v648 = vmul.f32 1.0, %v647
    %v649 = vrcp.pop %v594
    %v650 = vmul.f32 1.0, %v649
    %v651 = vrcp.pop %v595
    %v652 = vmul.f32 1.0, %v651
    %v653 = vrcp.pop %v596
    %v654 = vmul.f32 1.0, %v653
    %v655 = vrcp.pop %v597
    %v656 = vmul.f32 1.0, %v655
    %v657 = vrcp.pop %v598
    %v658 = vmul.f32 1.0, %v657
    %v659 = vrcp.pop %v599
    %v660 = vmul.f32 1.0, %v659
    %v661 = vrcp.pop %v600
    %v662 = vmul.f32 1.0, %v661
    %v663 = vrcp.pop %v601
    %v664 = vmul.f32 1.0, %v663
    %v665 = vrcp.pop %v602
    %v666 = vmul.f32 1.0, %v665
    %v667 = vmul.f32 %v188, %v604
    %v668 = vmul.f32 %v190, %v606
    %v669 = vmul.f32 %v194, %v608
    %v670 = vmul.f32 %v196, %v610
    %v671 = vmul.f32 %v200, %v612
    %v672 = vmul.f32 %v202, %v614
    %v673 = vmul.f32 %v206, %v616
    %v674 = vmul.f32 %v208, %v618
    %v675 = vmul.f32 %v212, %v620
    %v676 = vmul.f32 %v214, %v622
    %v677 = vmul.f32 %v218, %v624
    %v678 = vmul.f32 %v220, %v626
    %v679 = vmul.f32 %v224, %v628
    %v680 = vmul.f32 %v226, %v630
    %v681 = vmul.f32 %v230, %v632
    %v682 = vmul.f32 %v232, %v634
    %v683 = vmul.f32 %v236, %v636
    %v684 = vmul.f32 %v238, %v638
    %v685 = vmul.f32 %v242, %v640
    %v686 = vmul.f32 %v244, %v642
    %v687 = vmul.f32 %v248, %v644
    %v688 = vmul.f32 %v250, %v646
    %v689 = vmul.f32 %v254, %v648
    %v690 = vmul.f32 %v256, %v650
    %v691 = vmul.f32 %v260, %v652
    %v692 = vmul.f32 %v262, %v654
    %v693 = vmul.f32 %v266, %v656
    %v694 = vmul.f32 %v268, %v658
    %v695 = vmul.f32 %v272, %v660
    %v696 = vmul.f32 %v274, %v662
    %v697 = vmul.f32 %v278, %v664
    %v698 = vmul.f32 %v280, %v666
    %v699 = vmul.f32 %v667, %v381
    %v700 = vmul.f32 %v668, %v383
    %v701 = vmul.f32 %v669, %v387
    %v702 = vmul.f32 %v670, %v389
    %v703 = vmul.f32 %v671, %v393
    %v704 = vmul.f32 %v672, %v395
    %v705 = vmul.f32 %v673, %v399
    %v706 = vmul.f32 %v674, %v401
    %v707 = vmul.f32 %v675, %v405
    %v708 = vmul.f32 %v676, %v407
    %v709 = vmul.f32 %v677, %v411
    %v710 = vmul.f32 %v678, %v413
    %v711 = vmul.f32 %v679, %v417
    %v712 = vmul.f32 %v680, %v419
    %v713 = vmul.f32 %v681, %v423
    %v714 = vmul.f32 %v682, %v425
    %v715 = vmul.f32 %v683, %v429
    %v716 = vmul.f32 %v684, %v431
    %v717 = vmul.f32 %v685, %v435
    %v718 = vmul.f32 %v686, %v437
    %v719 = vmul.f32 %v687, %v441
    %v720 = vmul.f32 %v688, %v443
    %v721 = vmul.f32 %v689, %v447
    %v722 = vmul.f32 %v690, %v449
    %v723 = vmul.f32 %v691, %v453
    %v724 = vmul.f32 %v692, %v455
    %v725 = vmul.f32 %v693, %v459
    %v726 = vmul.f32 %v694, %v461
    %v727 = vmul.f32 %v695, %v465
    %v728 = vmul.f32 %v696, %v467
    %v729 = vmul.f32 %v697, %v471
    %v730 = vmul.f32 %v698, %v473
    %v731 = vld [vmem:[#allocation9] sm:$0xff]
    %v732 = vld [vmem:[#allocation9 + $0x8] sm:$0xff]
    %v733 = vld [vmem:[#allocation9 + $0x10] sm:$0xff]
    %v734 = vld [vmem:[#allocation9 + $0x18] sm:$0xff]
    %v735 = vld [vmem:[#allocation9 + $0x20] sm:$0xff]
    %v736 = vld [vmem:[#allocation9 + $0x28] sm:$0xff]
    %v737 = vld [vmem:[#allocation9 + $0x30] sm:$0xff]
    %v738 = vld [vmem:[#allocation9 + $0x38] sm:$0xff]
    %v739 = vld [vmem:[#allocation9 + $0x40] sm:$0xff]
    %v740 = vld [vmem:[#allocation9 + $0x48] sm:$0xff]
    %v741 = vld [vmem:[#allocation9 + $0x50] sm:$0xff]
    %v742 = vld [vmem:[#allocation9 + $0x58] sm:$0xff]
    %v743 = vld [vmem:[#allocation9 + $0x60] sm:$0xff]
    %v744 = vld [vmem:[#allocation9 + $0x68] sm:$0xff]
    %v745 = vld [vmem:[#allocation9 + $0x70] sm:$0xff]
    %v746 = vld [vmem:[#allocation9 + $0x78] sm:$0xff]
    %v747 = vld [vmem:[#allocation9 + $0x80] sm:$0xff]
    %v748 = vld [vmem:[#allocation9 + $0x88] sm:$0xff]
    %v749 = vld [vmem:[#allocation9 + $0x90] sm:$0xff]
    %v750 = vld [vmem:[#allocation9 + $0x98] sm:$0xff]
    %v751 = vld [vmem:[#allocation9 + $0xa0] sm:$0xff]
    %v752 = vld [vmem:[#allocation9 + $0xa8] sm:$0xff]
    %v753 = vld [vmem:[#allocation9 + $0xb0] sm:$0xff]
    %v754 = vld [vmem:[#allocation9 + $0xb8] sm:$0xff]
    %v755 = vld [vmem:[#allocation9 + $0xc0] sm:$0xff]
    %v756 = vld [vmem:[#allocation9 + $0xc8] sm:$0xff]
    %v757 = vld [vmem:[#allocation9 + $0xd0] sm:$0xff]
    %v758 = vld [vmem:[#allocation9 + $0xd8] sm:$0xff]
    %v759 = vld [vmem:[#allocation9 + $0xe0] sm:$0xff]
    %v760 = vld [vmem:[#allocation9 + $0xe8] sm:$0xff]
    %v761 = vld [vmem:[#allocation9 + $0xf0] sm:$0xff]
    %v762 = vld [vmem:[#allocation9 + $0xf8] sm:$0xff]
    %763 = vmatprep.subr.mxu0 0.0
    %764 = vmatpush1.msra.mxu0 %v731
    %765 = vmatprep.subr.mxu0 0.0
    %766 = vmatpush1.msra.mxu0 %v732
    %767 = vmatprep.subr.mxu0 0.0
    %768 = vmatpush1.msra.mxu0 %v733
    %769 = vmatprep.subr.mxu0 0.0
    %770 = vmatpush1.msra.mxu0 %v734
    %771 = vmatprep.subr.mxu0 0.0
    %772 = vmatpush1.msra.mxu0 %v735
    %773 = vmatprep.subr.mxu0 0.0
    %774 = vmatpush1.msra.mxu0 %v736
    %775 = vmatprep.subr.mxu0 0.0
    %776 = vmatpush1.msra.mxu0 %v737
    %777 = vmatprep.subr.mxu0 0.0
    %778 = vmatpush1.msra.mxu0 %v738
    %779 = vmatprep.subr.mxu0 0.0
    %780 = vmatpush1.msra.mxu0 %v739
    %781 = vmatprep.subr.mxu0 0.0
    %782 = vmatpush1.msra.mxu0 %v740
    %783 = vmatprep.subr.mxu0 0.0
    %784 = vmatpush1.msra.mxu0 %v741
    %785 = vmatprep.subr.mxu0 0.0
    %786 = vmatpush1.msra.mxu0 %v742
    %787 = vmatprep.subr.mxu0 0.0
    %788 = vmatpush1.msra.mxu0 %v743
    %789 = vmatprep.subr.mxu0 0.0
    %790 = vmatpush1.msra.mxu0 %v744
    %791 = vmatprep.subr.mxu0 0.0
    %792 = vmatpush1.msra.mxu0 %v745
    %793 = vmatprep.subr.mxu0 0.0
    %794 = vmatpush1.msra.mxu0 %v746
    %795 = vmatprep.subr.mxu0 0.0
    %796 = vmatpush1.msra.mxu0 %v747
    %797 = vmatprep.subr.mxu0 0.0
    %798 = vmatpush1.msra.mxu0 %v748
    %799 = vmatprep.subr.mxu0 0.0
    %800 = vmatpush1.msra.mxu0 %v749
    %801 = vmatprep.subr.mxu0 0.0
    %802 = vmatpush1.msra.mxu0 %v750
    %803 = vmatprep.subr.mxu0 0.0
    %804 = vmatpush1.msra.mxu0 %v751
    %805 = vmatprep.subr.mxu0 0.0
    %806 = vmatpush1.msra.mxu0 %v752
    %807 = vmatprep.subr.mxu0 0.0
    %808 = vmatpush1.msra.mxu0 %v753
    %809 = vmatprep.subr.mxu0 0.0
    %810 = vmatpush1.msra.mxu0 %v754
    %811 = vmatprep.subr.mxu0 0.0
    %812 = vmatpush1.msra.mxu0 %v755
    %813 = vmatprep.subr.mxu0 0.0
    %814 = vmatpush1.msra.mxu0 %v756
    %815 = vmatprep.subr.mxu0 0.0
    %816 = vmatpush1.msra.mxu0 %v757
    %817 = vmatprep.subr.mxu0 0.0
    %818 = vmatpush1.msra.mxu0 %v758
    %819 = vmatprep.subr.mxu0 0.0
    %820 = vmatpush1.msra.mxu0 %v759
    %821 = vmatprep.subr.mxu0 0.0
    %822 = vmatpush1.msra.mxu0 %v760
    %823 = vmatprep.subr.mxu0 0.0
    %824 = vmatpush1.msra.mxu0 %v761
    %825 = vmatprep.subr.mxu0 0.0
    %826 = vmatpush1.msra.mxu0 %v762
    %827 = vmatprep.mubr.f32.mxu0 %v700
    %828 = vmatmul.mubr.f32.gmra.mrb[0].mxu0 %v699
    %v829 = vpop.f32.mrb[0].mxu0
    %v830 = vadd.f32 0.0, %v829
    %v831 = vpop.f32.mrb[0].mxu0
    %832 = vmatprep.mubr.f32.mxu0 %v702
    %833 = vmatmul.mubr.f32.gmra.mrb[0].mxu0 %v701
    %v834 = vpop.f32.mrb[0].mxu0
    %v835 = vadd.f32 0.0, %v834
    %v836 = vpop.f32.mrb[0].mxu0
    %837 = vmatprep.mubr.f32.mxu0 %v704
    %838 = vmatmul.mubr.f32.gmra.mrb[0].mxu0 %v703
    %v839 = vpop.f32.mrb[0].mxu0
    %v840 = vadd.f32 0.0, %v839
    %v841 = vpop.f32.mrb[0].mxu0
    %842 = vmatprep.mubr.f32.mxu0 %v706
    %843 = vmatmul.mubr.f32.gmra.mrb[0].mxu0 %v705
    %v844 = vpop.f32.mrb[0].mxu0
    %v845 = vadd.f32 0.0, %v844
    %v846 = vpop.f32.mrb[0].mxu0
    %847 = vmatprep.mubr.f32.mxu0 %v708
    %848 = vmatmul.mubr.f32.gmra.mrb[0].mxu0 %v707
    %v849 = vpop.f32.mrb[0].mxu0
    %v850 = vadd.f32 0.0, %v849
    %v851 = vpop.f32.mrb[0].mxu0
    %852 = vmatprep.mubr.f32.mxu0 %v710
    %853 = vmatmul.mubr.f32.gmra.mrb[0].mxu0 %v709
    %v854 = vpop.f32.mrb[0].mxu0
    %v855 = vadd.f32 0.0, %v854
    %v856 = vpop.f32.mrb[0].mxu0
    %857 = vmatprep.mubr.f32.mxu0 %v712
    %858 = vmatmul.mubr.f32.gmra.mrb[0].mxu0 %v711
    %v859 = vpop.f32.mrb[0].mxu0
    %v860 = vadd.f32 0.0, %v859
    %v861 = vpop.f32.mrb[0].mxu0
    %862 = vmatprep.mubr.f32.mxu0 %v714
    %863 = vmatmul.mubr.f32.gmra.mrb[0].mxu0 %v713
    %v864 = vpop.f32.mrb[0].mxu0
    %v865 = vadd.f32 0.0, %v864
    %v866 = vpop.f32.mrb[0].mxu0
    %867 = vmatprep.mubr.f32.mxu0 %v716
    %868 = vmatmul.mubr.f32.gmra.mrb[0].mxu0 %v715
    %v869 = vpop.f32.mrb[0].mxu0
    %v870 = vadd.f32 0.0, %v869
    %v871 = vpop.f32.mrb[0].mxu0
    %872 = vmatprep.mubr.f32.mxu0 %v718
    %873 = vmatmul.mubr.f32.gmra.mrb[0].mxu0 %v717
    %v874 = vpop.f32.mrb[0].mxu0
    %v875 = vadd.f32 0.0, %v874
    %v876 = vpop.f32.mrb[0].mxu0
    %877 = vmatprep.mubr.f32.mxu0 %v720
    %878 = vmatmul.mubr.f32.gmra.mrb[0].mxu0 %v719
    %v879 = vpop.f32.mrb[0].mxu0
    %v880 = vadd.f32 0.0, %v879
    %v881 = vpop.f32.mrb[0].mxu0
    %882 = vmatprep.mubr.f32.mxu0 %v722
    %883 = vmatmul.mubr.f32.gmra.mrb[0].mxu0 %v721
    %v884 = vpop.f32.mrb[0].mxu0
    %v885 = vadd.f32 0.0, %v884
    %v886 = vpop.f32.mrb[0].mxu0
    %887 = vmatprep.mubr.f32.mxu0 %v724
    %888 = vmatmul.mubr.f32.gmra.mrb[0].mxu0 %v723
    %v889 = vpop.f32.mrb[0].mxu0
    %v890 = vadd.f32 0.0, %v889
    %v891 = vpop.f32.mrb[0].mxu0
    %892 = vmatprep.mubr.f32.mxu0 %v726
    %893 = vmatmul.mubr.f32.gmra.mrb[0].mxu0 %v725
    %v894 = vpop.f32.mrb[0].mxu0
    %v895 = vadd.f32 0.0, %v894
    %v896 = vpop.f32.mrb[0].mxu0
    %897 = vmatprep.mubr.f32.mxu0 %v728
    %898 = vmatmul.mubr.f32.gmra.mrb[0].mxu0 %v727
    %v899 = vpop.f32.mrb[0].mxu0
    %v900 = vadd.f32 0.0, %v899
    %v901 = vpop.f32.mrb[0].mxu0
    %902 = vmatprep.mubr.f32.mxu0 %v730
    %903 = vmatmul.mubr.f32.gmra.mrb[0].mxu0 %v729
    %v904 = vpop.f32.mrb[0].mxu0
    %v905 = vadd.f32 0.0, %v904
    %v906 = vpop.f32.mrb[0].mxu0
    %907 = vdwg.mxu0
    %p908 = scmp.eq.s32.totalorder 0, 0
    // Predicated region
    $region34: #{tpu_custom_call.1} parent=1 // pred_check
      %p909 = pneg %p908
    $region35: #{tpu_custom_call.1} parent=1 // pred_check_branch
      %911 = sbr.rel (%p909) target = $region37
    $region36: #{tpu_custom_call.1} parent=1 // pred_region
      %912 = vst [vmem:[#allocation2] sm:$0xff] %v830
      %913 = vst [vmem:[#allocation2 + $0x8] sm:$0xff] %v835
      %914 = vst [vmem:[#allocation2 + $0x10] sm:$0xff] %v840
      %915 = vst [vmem:[#allocation2 + $0x18] sm:$0xff] %v845
      %916 = vst [vmem:[#allocation2 + $0x20] sm:$0xff] %v850
      %917 = vst [vmem:[#allocation2 + $0x28] sm:$0xff] %v855
      %918 = vst [vmem:[#allocation2 + $0x30] sm:$0xff] %v860
      %919 = vst [vmem:[#allocation2 + $0x38] sm:$0xff] %v865
      %920 = vst [vmem:[#allocation2 + $0x40] sm:$0xff] %v870
      %921 = vst [vmem:[#allocation2 + $0x48] sm:$0xff] %v875
      %922 = vst [vmem:[#allocation2 + $0x50] sm:$0xff] %v880
      %923 = vst [vmem:[#allocation2 + $0x58] sm:$0xff] %v885
      %924 = vst [vmem:[#allocation2 + $0x60] sm:$0xff] %v890
      %925 = vst [vmem:[#allocation2 + $0x68] sm:$0xff] %v895
      %926 = vst [vmem:[#allocation2 + $0x70] sm:$0xff] %v900
      %927 = vst [vmem:[#allocation2 + $0x78] sm:$0xff] %v905
    $region37: #{tpu_custom_call.1} parent=1 // pred_fallthru
      _
    %p928 = scmp.gt.s32.totalorder 0, 0
    // Predicated region
    $region38: #{tpu_custom_call.1} parent=1 // pred_check
      %p929 = pneg %p928
    $region39: #{tpu_custom_call.1} parent=1 // pred_check_branch
      %931 = sbr.rel (%p929) target = $region41
    $region40: #{tpu_custom_call.1} parent=1 // pred_region
      %v932 = vld [vmem:[#allocation2] sm:$0xff]
      %v933 = vld [vmem:[#allocation2 + $0x8] sm:$0xff]
      %v934 = vld [vmem:[#allocation2 + $0x10] sm:$0xff]
      %v935 = vld [vmem:[#allocation2 + $0x18] sm:$0xff]
      %v936 = vld [vmem:[#allocation2 + $0x20] sm:$0xff]
      %v937 = vld [vmem:[#allocation2 + $0x28] sm:$0xff]
      %v938 = vld [vmem:[#allocation2 + $0x30] sm:$0xff]
      %v939 = vld [vmem:[#allocation2 + $0x38] sm:$0xff]
      %v940 = vld [vmem:[#allocation2 + $0x40] sm:$0xff]
      %v941 = vld [vmem:[#allocation2 + $0x48] sm:$0xff]
      %v942 = vld [vmem:[#allocation2 + $0x50] sm:$0xff]
      %v943 = vld [vmem:[#allocation2 + $0x58] sm:$0xff]
      %v944 = vld [vmem:[#allocation2 + $0x60] sm:$0xff]
      %v945 = vld [vmem:[#allocation2 + $0x68] sm:$0xff]
      %v946 = vld [vmem:[#allocation2 + $0x70] sm:$0xff]
      %v947 = vld [vmem:[#allocation2 + $0x78] sm:$0xff]
      %v948 = vadd.f32 %v932, %v830
      %v949 = vadd.f32 %v933, %v835
      %v950 = vadd.f32 %v934, %v840
      %v951 = vadd.f32 %v935, %v845
      %v952 = vadd.f32 %v936, %v850
      %v953 = vadd.f32 %v937, %v855
      %v954 = vadd.f32 %v938, %v860
      %v955 = vadd.f32 %v939, %v865
      %v956 = vadd.f32 %v940, %v870
      %v957 = vadd.f32 %v941, %v875
      %v958 = vadd.f32 %v942, %v880
      %v959 = vadd.f32 %v943, %v885
      %v960 = vadd.f32 %v944, %v890
      %v961 = vadd.f32 %v945, %v895
      %v962 = vadd.f32 %v946, %v900
      %v963 = vadd.f32 %v947, %v905
      %964 = vst [vmem:[#allocation2] sm:$0xff] %v948
      %965 = vst [vmem:[#allocation2 + $0x8] sm:$0xff] %v949
      %966 = vst [vmem:[#allocation2 + $0x10] sm:$0xff] %v950
      %967 = vst [vmem:[#allocation2 + $0x18] sm:$0xff] %v951
      %968 = vst [vmem:[#allocation2 + $0x20] sm:$0xff] %v952
      %969 = vst [vmem:[#allocation2 + $0x28] sm:$0xff] %v953
      %970 = vst [vmem:[#allocation2 + $0x30] sm:$0xff] %v954
      %971 = vst [vmem:[#allocation2 + $0x38] sm:$0xff] %v955
      %972 = vst [vmem:[#allocation2 + $0x40] sm:$0xff] %v956
      %973 = vst [vmem:[#allocation2 + $0x48] sm:$0xff] %v957
      %974 = vst [vmem:[#allocation2 + $0x50] sm:$0xff] %v958
      %975 = vst [vmem:[#allocation2 + $0x58] sm:$0xff] %v959
      %976 = vst [vmem:[#allocation2 + $0x60] sm:$0xff] %v960
      %977 = vst [vmem:[#allocation2 + $0x68] sm:$0xff] %v961
      %978 = vst [vmem:[#allocation2 + $0x70] sm:$0xff] %v962
      %979 = vst [vmem:[#allocation2 + $0x78] sm:$0xff] %v963
    $region41: #{tpu_custom_call.1} parent=1 // pred_fallthru
      _
    // Predicated region
    $region42: #{tpu_custom_call.1} parent=1 // pred_check
      %p980 = pneg %p908
    $region43: #{tpu_custom_call.1} parent=1 // pred_check_branch
      %982 = sbr.rel (%p980) target = $region45
    $region44: #{tpu_custom_call.1} parent=1 // pred_region
      %v983 = vld [vmem:[#allocation2] sm:$0xff]
      %v984 = vld [vmem:[#allocation2 + $0x8] sm:$0xff]
      %v985 = vld [vmem:[#allocation2 + $0x10] sm:$0xff]
      %v986 = vld [vmem:[#allocation2 + $0x18] sm:$0xff]
      %v987 = vld [vmem:[#allocation2 + $0x20] sm:$0xff]
      %v988 = vld [vmem:[#allocation2 + $0x28] sm:$0xff]
      %v989 = vld [vmem:[#allocation2 + $0x30] sm:$0xff]
      %v990 = vld [vmem:[#allocation2 + $0x38] sm:$0xff]
      %v991 = vld [vmem:[#allocation2 + $0x40] sm:$0xff]
      %v992 = vld [vmem:[#allocation2 + $0x48] sm:$0xff]
      %v993 = vld [vmem:[#allocation2 + $0x50] sm:$0xff]
      %v994 = vld [vmem:[#allocation2 + $0x58] sm:$0xff]
      %v995 = vld [vmem:[#allocation2 + $0x60] sm:$0xff]
      %v996 = vld [vmem:[#allocation2 + $0x68] sm:$0xff]
      %v997 = vld [vmem:[#allocation2 + $0x70] sm:$0xff]
      %v998 = vld [vmem:[#allocation2 + $0x78] sm:$0xff]
      %999 = vst [vmem:[#allocation11] sm:$0xff] %v983
      %1000 = vst [vmem:[#allocation11 + $0x8] sm:$0xff] %v984
      %1001 = vst [vmem:[#allocation11 + $0x10] sm:$0xff] %v985
      %1002 = vst [vmem:[#allocation11 + $0x18] sm:$0xff] %v986
      %1003 = vst [vmem:[#allocation11 + $0x20] sm:$0xff] %v987
      %1004 = vst [vmem:[#allocation11 + $0x28] sm:$0xff] %v988
      %1005 = vst [vmem:[#allocation11 + $0x30] sm:$0xff] %v989
      %1006 = vst [vmem:[#allocation11 + $0x38] sm:$0xff] %v990
      %1007 = vst [vmem:[#allocation11 + $0x40] sm:$0xff] %v991
      %1008 = vst [vmem:[#allocation11 + $0x48] sm:$0xff] %v992
      %1009 = vst [vmem:[#allocation11 + $0x50] sm:$0xff] %v993
      %1010 = vst [vmem:[#allocation11 + $0x58] sm:$0xff] %v994
      %1011 = vst [vmem:[#allocation11 + $0x60] sm:$0xff] %v995
      %1012 = vst [vmem:[#allocation11 + $0x68] sm:$0xff] %v996
      %1013 = vst [vmem:[#allocation11 + $0x70] sm:$0xff] %v997
      %1014 = vst [vmem:[#allocation11 + $0x78] sm:$0xff] %v998
    $region45: #{tpu_custom_call.1} parent=1 // pred_fallthru
      _
    // Predicated region
    $region46: #{tpu_custom_call.1} parent=1 // pred_check
      _
    $region47: #{tpu_custom_call.1} parent=1 // pred_check_branch
      %1016 = sbr.rel (0) target = $region49
    $region48: #{tpu_custom_call.1} parent=1 // pred_region
      %s1018 = ssub.s32 2048, 2048
      %1019 = vsyncadd [#allocation5], %s1018
      %s1020 = sshll.u32 [#allocation11], 4
      %s1021 = int_to_ptr.vmem [resolvable:$true] %s1020
      %1026 = dma.vmem_to_hbm [thread:$0]  %s1021, 2048, %s4, [#allocation5], 128, 128, 8
    $region49: #{tpu_custom_call.1} parent=1 // pred_fallthru
      _
    // Predicated region
    $region50: #{tpu_custom_call.1} parent=1 // pred_check
      _
    $region51: #{tpu_custom_call.1} parent=1 // pred_check_branch
      %1028 = sbr.rel (0) target = $region53
    $region52: #{tpu_custom_call.1} parent=1 // pred_region
      %1029 = dma.done [#allocation5], 2048
    $region53: #{tpu_custom_call.1} parent=1 // pred_fallthru
      _
    %1030 = vsyncpa [#allocation4], 1
    %1031 = vsyncpa [#allocation7], 1
    %1032 = vsyncpa [#allocation10], 1
    %1033 = vsyncpa [#allocation5], 1

</llo_original>
